<compile_context>
chip_gen: v7x
topology: tpu7x:2x2x1
jax: 0.10.0
libtpu: 0.0.40
codegen_flags: <defaults>
</compile_context>

<pallas_src>
import jax
import jax.numpy as jnp
from jax.experimental import pallas as pl
from jax.experimental.pallas import tpu as pltpu


def chessnet_kernel(x_ref, w1_ref, b1_ref, w2_ref, b2_ref, w3_ref, b3_ref, o_ref):
    # Stream x tile in, cast to bf16 for the MXU.
    x = x_ref[...].astype(jnp.bfloat16)

    # fc1 + relu   [TB,64] @ [64,128] -> [TB,128]
    h1 = jnp.dot(x, w1_ref[...], preferred_element_type=jnp.float32)
    h1 = jnp.maximum(h1 + b1_ref[...], 0.0).astype(jnp.bfloat16)

    # fc2 + relu   [TB,128] @ [128,64] -> [TB,64]
    h2 = jnp.dot(h1, w2_ref[...], preferred_element_type=jnp.float32)
    h2 = jnp.maximum(h2 + b2_ref[...], 0.0).astype(jnp.bfloat16)

    # fc3 at padded N=128 (lane-dense MXU result), store only the real 3 lanes.
    out = jnp.dot(h2, w3_ref[...], preferred_element_type=jnp.float32) + b3_ref[...]
    o_ref[...] = out[:, :3]


def _prep_params(params):
    """One-time param prep: bf16 weights, f32 biases, fc3 padded to N=128."""
    w1 = params["w1"].astype(jnp.bfloat16)
    w2 = params["w2"].astype(jnp.bfloat16)
    w3p = jnp.zeros((64, 128), jnp.bfloat16).at[:, :3].set(
        params["w3"].astype(jnp.bfloat16))
    b1 = params["b1"].astype(jnp.float32)
    b2 = params["b2"].astype(jnp.float32)
    b3p = jnp.zeros((1, 128), jnp.float32).at[:, :3].set(
        params["b3"].astype(jnp.float32))
    return w1, b1, w2, b2, w3p, b3p


def chessnet_forward(x, params, *, tb=1024):
    """x: [B, 64] f32. params: w1,b1,w2,b2,w3,b3 (weights [in,out], biases [1,out])."""
    B = x.shape[0]
    w1, b1, w2, b2, w3p, b3p = _prep_params(params)

    # Batch tile: multiple of 8 sublanes, no larger than needed for tiny B.
    b_pad8 = ((B + 7) // 8) * 8
    TB = min(tb, b_pad8)
    pB = pl.cdiv(b_pad8, TB) * TB
    if pB != B:
        x = jnp.pad(x, ((0, pB - B), (0, 0)))

    const2d = lambda i: (0, 0)  # weights / biases: VMEM-resident across grid steps

    # Advisory cost hint for XLA scheduling around the custom call.
    flops = 2 * pB * (64 * 128 + 128 * 64 + 64 * 128)
    param_bytes = (64 * 128 + 128 * 64 + 64 * 128) * 2 + (128 + 64 + 128) * 4
    bytes_accessed = pB * (64 * 4 + 3 * 4) + param_bytes
    cost = pl.CostEstimate(flops=flops, transcendentals=0,
                           bytes_accessed=bytes_accessed)

    out = pl.pallas_call(
        chessnet_kernel,
        out_shape=jax.ShapeDtypeStruct((pB, 3), jnp.float32),
        grid=(pB // TB,),
        in_specs=[
            pl.BlockSpec((TB, 64), lambda i: (i, 0)),   # x: streamed per tile
            pl.BlockSpec((64, 128), const2d),           # w1
            pl.BlockSpec((1, 128), const2d),            # b1
            pl.BlockSpec((128, 64), const2d),           # w2
            pl.BlockSpec((1, 64), const2d),             # b2
            pl.BlockSpec((64, 128), const2d),           # w3 (padded N=128)
            pl.BlockSpec((1, 128), const2d),            # b3 (padded N=128)
        ],
        out_specs=pl.BlockSpec((TB, 3), lambda i: (i, 0)),
        compiler_params=pltpu.CompilerParams(
            dimension_semantics=("parallel",),
            vmem_limit_bytes=32 * 1024 * 1024,
        ),
        cost_estimate=cost,
    )(x, w1, b1, w2, b2, w3p, b3p)

    return out[:B] if pB != B else out


def init_params(key):
    """Deterministic init mirroring nn.Linear shapes (stored transposed as [in, out])."""
    ks = jax.random.split(key, 6)

    def lin(kw, kb, fan_in, fan_out):
        bound = 1.0 / jnp.sqrt(fan_in)
        w = jax.random.uniform(kw, (fan_in, fan_out), jnp.float32, -bound, bound)
        b = jax.random.uniform(kb, (1, fan_out), jnp.float32, -bound, bound)
        return w, b

    w1, b1 = lin(ks[0], ks[1], 64, 128)
    w2, b2 = lin(ks[2], ks[3], 128, 64)
    w3, b3 = lin(ks[4], ks[5], 64, 3)
    return {"w1": w1, "b1": b1, "w2": w2, "b2": b2, "w3": w3, "b3": b3}


def reference_forward_f32(x, p):
    h1 = jnp.maximum(x @ p["w1"] + p["b1"], 0.0)
    h2 = jnp.maximum(h1 @ p["w2"] + p["b2"], 0.0)
    return h2 @ p["w3"] + p["b3"]


def reference_forward_bf16(x, p):
    """Matches the kernel's mixed-precision math (bf16 operands, f32 accumulation)."""
    w1 = p["w1"].astype(jnp.bfloat16)
    w2 = p["w2"].astype(jnp.bfloat16)
    w3 = p["w3"].astype(jnp.bfloat16)
    h1 = jnp.dot(x.astype(jnp.bfloat16), w1, preferred_element_type=jnp.float32) + p["b1"]
    h1 = jnp.maximum(h1, 0.0).astype(jnp.bfloat16)
    h2 = jnp.dot(h1, w2, preferred_element_type=jnp.float32) + p["b2"]
    h2 = jnp.maximum(h2, 0.0).astype(jnp.bfloat16)
    return jnp.dot(h2, w3, preferred_element_type=jnp.float32) + p["b3"]


if __name__ == "__main__":
    key = jax.random.PRNGKey(0)
    k_x, k_p = jax.random.split(key)
    B = 8
    x = jax.random.normal(k_x, (B, 64), jnp.float32)
    params = init_params(k_p)

    fwd = jax.jit(lambda x: chessnet_forward(x, params))
    out = jax.block_until_ready(fwd(x))
    assert out.shape == (B, 3), out.shape

    # Exact-math check vs a reference using the same bf16 operands / f32 accum.
    ref_bf16 = reference_forward_bf16(x, params)
    assert jnp.allclose(out, ref_bf16, atol=1e-4, rtol=1e-4), "mismatch vs bf16 reference"

    # Loose sanity check vs the full-f32 reference (bf16 quantization noise only).
    ref_f32 = reference_forward_f32(x, params)
    assert jnp.allclose(out, ref_f32, atol=5e-2, rtol=5e-2), "mismatch vs f32 reference"

    print("KERNEL_OK")
</pallas_src>

<mosaic_0001>
module attributes {stable_mosaic.version = 11 : i64} {
  func.func @chessnet_kernel(%arg0: i32, %arg1: memref<8x64xf32, #tpu.memory_space<vmem>>, %arg2: memref<64x128xbf16, #tpu.memory_space<vmem>>, %arg3: memref<1x128xf32, #tpu.memory_space<vmem>>, %arg4: memref<128x64xbf16, #tpu.memory_space<vmem>>, %arg5: memref<1x64xf32, #tpu.memory_space<vmem>>, %arg6: memref<64x128xbf16, #tpu.memory_space<vmem>>, %arg7: memref<1x128xf32, #tpu.memory_space<vmem>>, %arg8: memref<8x3xf32, #tpu.memory_space<vmem>>) attributes {dimension_semantics = [#tpu.dimension_semantics<parallel>], iteration_bounds = array<i64: 1>, scalar_prefetch = 0 : i64, scratch_operands = 0 : i64, tpu.core_type = #tpu.core_type<tc>, window_params = [{transform_indices = @transform_0, window_bounds = array<i64: 8, 64>}, {pipeline_mode = #tpu.pipeline_mode<synchronous>, transform_indices = @transform_1, window_bounds = array<i64: 64, 128>}, {pipeline_mode = #tpu.pipeline_mode<synchronous>, transform_indices = @transform_2, window_bounds = array<i64: 1, 128>}, {pipeline_mode = #tpu.pipeline_mode<synchronous>, transform_indices = @transform_3, window_bounds = array<i64: 128, 64>}, {pipeline_mode = #tpu.pipeline_mode<synchronous>, transform_indices = @transform_4, window_bounds = array<i64: 1, 64>}, {pipeline_mode = #tpu.pipeline_mode<synchronous>, transform_indices = @transform_5, window_bounds = array<i64: 64, 128>}, {pipeline_mode = #tpu.pipeline_mode<synchronous>, transform_indices = @transform_6, window_bounds = array<i64: 1, 128>}, {transform_indices = @transform_7, window_bounds = array<i64: 8, 3>}]} {
    %c0 = arith.constant 0 : index
    %c0_0 = arith.constant 0 : index
    %0 = vector.load %arg1[%c0, %c0_0] : memref<8x64xf32, #tpu.memory_space<vmem>>, vector<8x64xf32>
    %1 = arith.truncf %0 : vector<8x64xf32> to vector<8x64xbf16>
    %c0_1 = arith.constant 0 : index
    %c0_2 = arith.constant 0 : index
    %2 = vector.load %arg2[%c0_1, %c0_2] : memref<64x128xbf16, #tpu.memory_space<vmem>>, vector<64x128xbf16>
    %cst = arith.constant dense<0.000000e+00> : vector<8x128xf32>
    %3 = tpu.matmul %1, %2, %cst {dimension_numbers = #tpu.dot_dimension_numbers<[1], [0], [0], [1], [0, 0, 1, 1], [], []>} : vector<8x64xbf16>, vector<64x128xbf16>, vector<8x128xf32> -> vector<8x128xf32>
    %c0_3 = arith.constant 0 : index
    %c0_4 = arith.constant 0 : index
    %4 = vector.load %arg3[%c0_3, %c0_4] : memref<1x128xf32, #tpu.memory_space<vmem>>, vector<1x128xf32>
    %5 = vector.broadcast %4 : vector<1x128xf32> to vector<8x128xf32>
    %6 = arith.addf %3, %5 : vector<8x128xf32>
    %cst_5 = arith.constant 0.000000e+00 : f32
    %7 = vector.broadcast %cst_5 : f32 to vector<8x128xf32>
    %8 = arith.maximumf %6, %7 : vector<8x128xf32>
    %9 = arith.truncf %8 : vector<8x128xf32> to vector<8x128xbf16>
    %c0_6 = arith.constant 0 : index
    %c0_7 = arith.constant 0 : index
    %10 = vector.load %arg4[%c0_6, %c0_7] : memref<128x64xbf16, #tpu.memory_space<vmem>>, vector<128x64xbf16>
    %cst_8 = arith.constant dense<0.000000e+00> : vector<8x64xf32>
    %11 = tpu.matmul %9, %10, %cst_8 {dimension_numbers = #tpu.dot_dimension_numbers<[1], [0], [0], [1], [0, 0, 1, 1], [], []>} : vector<8x128xbf16>, vector<128x64xbf16>, vector<8x64xf32> -> vector<8x64xf32>
    %c0_9 = arith.constant 0 : index
    %c0_10 = arith.constant 0 : index
    %12 = vector.load %arg5[%c0_9, %c0_10] : memref<1x64xf32, #tpu.memory_space<vmem>>, vector<1x64xf32>
    %13 = vector.broadcast %12 : vector<1x64xf32> to vector<8x64xf32>
    %14 = arith.addf %11, %13 : vector<8x64xf32>
    %cst_11 = arith.constant 0.000000e+00 : f32
    %15 = vector.broadcast %cst_11 : f32 to vector<8x64xf32>
    %16 = arith.maximumf %14, %15 : vector<8x64xf32>
    %17 = arith.truncf %16 : vector<8x64xf32> to vector<8x64xbf16>
    %c0_12 = arith.constant 0 : index
    %c0_13 = arith.constant 0 : index
    %18 = vector.load %arg6[%c0_12, %c0_13] : memref<64x128xbf16, #tpu.memory_space<vmem>>, vector<64x128xbf16>
    %cst_14 = arith.constant dense<0.000000e+00> : vector<8x128xf32>
    %19 = tpu.matmul %17, %18, %cst_14 {dimension_numbers = #tpu.dot_dimension_numbers<[1], [0], [0], [1], [0, 0, 1, 1], [], []>} : vector<8x64xbf16>, vector<64x128xbf16>, vector<8x128xf32> -> vector<8x128xf32>
    %c0_15 = arith.constant 0 : index
    %c0_16 = arith.constant 0 : index
    %20 = vector.load %arg7[%c0_15, %c0_16] : memref<1x128xf32, #tpu.memory_space<vmem>>, vector<1x128xf32>
    %21 = vector.broadcast %20 : vector<1x128xf32> to vector<8x128xf32>
    %22 = arith.addf %19, %21 : vector<8x128xf32>
    %23 = vector.extract_strided_slice %22 {offsets = [0, 0], sizes = [8, 3], strides = [1, 1]} : vector<8x128xf32> to vector<8x3xf32>
    %c0_17 = arith.constant 0 : index
    %c0_18 = arith.constant 0 : index
    %24 = vector.load %arg8[%c0_17, %c0_18] : memref<8x3xf32, #tpu.memory_space<vmem>>, vector<8x3xf32>
    tpu.vector_store %arg8[%c0_17, %c0_18], %23 {strides = array<i32>} : memref<8x3xf32, #tpu.memory_space<vmem>>, vector<8x3xf32>,
    return
  }
  func.func @transform_0(%arg0: i32) -> (i32, i32) {
    %c0_i32 = arith.constant 0 : i32
    %c0_i32_0 = arith.constant 0 : i32
    return %arg0, %c0_i32 : i32, i32
  }
  func.func @transform_1(%arg0: i32) -> (i32, i32) {
    %c0_i32 = arith.constant 0 : i32
    %c0_i32_0 = arith.constant 0 : i32
    %c0_i32_1 = arith.constant 0 : i32
    return %c0_i32, %c0_i32_0 : i32, i32
  }
  func.func @transform_2(%arg0: i32) -> (i32, i32) {
    %c0_i32 = arith.constant 0 : i32
    %c0_i32_0 = arith.constant 0 : i32
    %c0_i32_1 = arith.constant 0 : i32
    return %c0_i32, %c0_i32_0 : i32, i32
  }
  func.func @transform_3(%arg0: i32) -> (i32, i32) {
    %c0_i32 = arith.constant 0 : i32
    %c0_i32_0 = arith.constant 0 : i32
    %c0_i32_1 = arith.constant 0 : i32
    return %c0_i32, %c0_i32_0 : i32, i32
  }
  func.func @transform_4(%arg0: i32) -> (i32, i32) {
    %c0_i32 = arith.constant 0 : i32
    %c0_i32_0 = arith.constant 0 : i32
    %c0_i32_1 = arith.constant 0 : i32
    return %c0_i32, %c0_i32_0 : i32, i32
  }
  func.func @transform_5(%arg0: i32) -> (i32, i32) {
    %c0_i32 = arith.constant 0 : i32
    %c0_i32_0 = arith.constant 0 : i32
    %c0_i32_1 = arith.constant 0 : i32
    return %c0_i32, %c0_i32_0 : i32, i32
  }
  func.func @transform_6(%arg0: i32) -> (i32, i32) {
    %c0_i32 = arith.constant 0 : i32
    %c0_i32_0 = arith.constant 0 : i32
    %c0_i32_1 = arith.constant 0 : i32
    return %c0_i32, %c0_i32_0 : i32, i32
  }
  func.func @transform_7(%arg0: i32) -> (i32, i32) {
    %c0_i32 = arith.constant 0 : i32
    %c0_i32_0 = arith.constant 0 : i32
    return %arg0, %c0_i32 : i32, i32
  }
}

</mosaic_0001>

<llo_original>
// kernel: _lambda_.1
$region0: #{_lambda_.1}
  #allocation0 [shape = 'u32[]', space=smem, size = 0x4, offset = 0x4, fixed_abs, tag = 'smem constant byte address 0x4 - core index']
  #allocation1 [shape = 'u32[144,128]{1,0:T(1,128)}', space=vmem, size = 0x12000, scoped, tag = 'internal scratch']
  %s0 = inlined_call_operand.vmem [shape: f32[8,64], index: 0, kind: input, shape index: {}]
  %s1 = inlined_call_operand.vmem [shape: bf16[64,128], index: 1, kind: input, shape index: {}]
  %s2 = inlined_call_operand.vmem [shape: f32[1,128], index: 2, kind: input, shape index: {}]
  %s3 = inlined_call_operand.vmem [shape: bf16[128,64], index: 3, kind: input, shape index: {}]
  %s4 = inlined_call_operand.vmem [shape: f32[1,64], index: 4, kind: input, shape index: {}]
  %s5 = inlined_call_operand.vmem [shape: bf16[64,128], index: 5, kind: input, shape index: {}]
  %s6 = inlined_call_operand.vmem [shape: f32[1,128], index: 6, kind: input, shape index: {}]
  %s7 = inlined_call_operand.vmem [shape: f32[8,3], index: 7, kind: output, shape index: {}]
  %s8 = sld [smem:[#allocation0]]
  $region38: #{_lambda_.1} parent=0
    _
  %s10 = ssub.s32 1, %s8
  %s11 = scalar_select 0, %s10, %s8
  // Predicated region
  $region2: #{_lambda_.1} parent=0 // pred_check
    _
  $region3: #{_lambda_.1} parent=0 // pred_check_branch
    %13 = sbr.rel (0) target = $region5
  $region4: #{_lambda_.1} parent=0 // pred_region
    _
  $region5: #{_lambda_.1} parent=0 // pred_fallthru
    _
  // Predicated region
  $region6: #{_lambda_.1} parent=0 // pred_check
    _
  $region7: #{_lambda_.1} parent=0 // pred_check_branch
    %15 = sbr.rel (0) target = $region9
  $region8: #{_lambda_.1} parent=0 // pred_region
    _
  $region9: #{_lambda_.1} parent=0 // pred_fallthru
    _
  // Predicated region
  $region10: #{_lambda_.1} parent=0 // pred_check
    _
  $region11: #{_lambda_.1} parent=0 // pred_check_branch
    %17 = sbr.rel (0) target = $region13
  $region12: #{_lambda_.1} parent=0 // pred_region
    _
  $region13: #{_lambda_.1} parent=0 // pred_fallthru
    _
  // Predicated region
  $region14: #{_lambda_.1} parent=0 // pred_check
    _
  $region15: #{_lambda_.1} parent=0 // pred_check_branch
    %19 = sbr.rel (0) target = $region17
  $region16: #{_lambda_.1} parent=0 // pred_region
    _
  $region17: #{_lambda_.1} parent=0 // pred_fallthru
    _
  // Predicated region
  $region18: #{_lambda_.1} parent=0 // pred_check
    _
  $region19: #{_lambda_.1} parent=0 // pred_check_branch
    %21 = sbr.rel (0) target = $region21
  $region20: #{_lambda_.1} parent=0 // pred_region
    _
  $region21: #{_lambda_.1} parent=0 // pred_fallthru
    _
  // Predicated region
  $region22: #{_lambda_.1} parent=0 // pred_check
    _
  $region23: #{_lambda_.1} parent=0 // pred_check_branch
    %23 = sbr.rel (0) target = $region25
  $region24: #{_lambda_.1} parent=0 // pred_region
    _
  $region25: #{_lambda_.1} parent=0 // pred_fallthru
    _
  // Predicated region
  $region26: #{_lambda_.1} parent=0 // pred_check
    _
  $region27: #{_lambda_.1} parent=0 // pred_check_branch
    %25 = sbr.rel (0) target = $region29
  $region28: #{_lambda_.1} parent=0 // pred_region
    _
  $region29: #{_lambda_.1} parent=0 // pred_fallthru
    _
  %v27 = vld [vmem:[%s0] sm:$0xff]
  %v28 = vpack.c.bf16 %v27, %v27
  %v29 = vld [vmem:[%s1] sm:$0xf]
  %v30 = vld [vmem:[%s1 + $0x4] sm:$0xf]
  %v31 = vld [vmem:[%s1 + $0x8] sm:$0xf]
  %v32 = vld [vmem:[%s1 + $0xc] sm:$0xf]
  %v33 = vld [vmem:[%s1 + $0x10] sm:$0xf]
  %v34 = vld [vmem:[%s1 + $0x14] sm:$0xf]
  %v35 = vld [vmem:[%s1 + $0x18] sm:$0xf]
  %v36 = vld [vmem:[%s1 + $0x1c] sm:$0xf]
  %v37 = vld [vmem:[%s2] sm:$0x1]
  %v39 = vlaneseq
  %v40 = vshrl.u32 %v39, 7
  %v41 = vsub.s32 0, %v40
  %v42 = vrot.slane %v37, %v41
  %v52 = vunpack.c.l.b16 %v29
  %v53 = vunpack.c.l.b16 %v30
  %v54 = vunpack.c.l.b16 %v31
  %v55 = vunpack.c.l.b16 %v32
  %v56 = vunpack.c.l.b16 %v33
  %v57 = vunpack.c.l.b16 %v34
  %v58 = vunpack.c.l.b16 %v35
  %v59 = vunpack.c.l.b16 %v36
  %v60 = vpack.c.b16 %v53, %v52
  %v61 = vpack.c.b16 %v55, %v54
  %v62 = vpack.c.b16 %v57, %v56
  %v63 = vpack.c.b16 %v59, %v58
  %vm68 = vcmask 523264
  %v70 = vsel %vm68, %v28, 0
  %72 = vmatprep.subr.bf16.mxu0 0
  %73 = vmatpush1.bf16.msra.mxu0 %v60
  %74 = vmatprep.subr.bf16.mxu0 0
  %75 = vmatpush1.bf16.msra.mxu0 %v61
  %76 = vmatprep.subr.bf16.mxu0 0
  %77 = vmatpush1.bf16.msra.mxu0 %v62
  %78 = vmatprep.subr.bf16.mxu0 0
  %79 = vmatpush1.bf16.msra.mxu0 %v63
  %80 = vmatprep.subr.bf16.mxu0 0
  %81 = vmatpush1.bf16.msra.mxu0 0
  %82 = vmatprep.subr.bf16.mxu0 0
  %83 = vmatpush1.bf16.msra.mxu0 0
  %84 = vmatprep.subr.bf16.mxu0 0
  %85 = vmatpush1.bf16.msra.mxu0 0
  %86 = vmatprep.subr.bf16.mxu0 0
  %87 = vmatpush1.bf16.msra.mxu0 0
  %88 = vmatprep.subr.bf16.mxu0 0
  %89 = vmatpush1.bf16.msra.mxu0 0
  %90 = vmatprep.subr.bf16.mxu0 0
  %91 = vmatpush1.bf16.msra.mxu0 0
  %92 = vmatprep.subr.bf16.mxu0 0
  %93 = vmatpush1.bf16.msra.mxu0 0
  %94 = vmatprep.subr.bf16.mxu0 0
  %95 = vmatpush1.bf16.msra.mxu0 0
  %96 = vmatprep.subr.bf16.mxu0 0
  %97 = vmatpush1.bf16.msra.mxu0 0
  %98 = vmatprep.subr.bf16.mxu0 0
  %99 = vmatpush1.bf16.msra.mxu0 0
  %100 = vmatprep.subr.bf16.mxu0 0
  %101 = vmatpush1.bf16.msra.mxu0 0
  %102 = vmatprep.subr.bf16.mxu0 0
  %103 = vmatpush1.bf16.msra.mxu0 0
  %104 = vmatprep.mubr.bf16.mxu0 0
  %105 = vmatmul.mubr.bf16.gmra.mrb[0].mxu0 %v70
  %v106 = vpop.f32.mrb[0].mxu0
  %v107 = vadd.f32 %v42, %v106
  %v108 = vpop.f32.mrb[0].mxu0
  %v109 = vpop.f32.mrb[0].mxu0
  %v110 = vpop.f32.mrb[0].mxu0
  %111 = vdwg.mxu0
  %v112 = vmax.f32 %v107, 0.0
  %v113 = vpack.c.bf16 %v112, %v112
  %v114 = vld [vmem:[%s3] sm:$0xf]
  %v115 = vld [vmem:[%s3 + $0x4] sm:$0xf]
  %v116 = vld [vmem:[%s3 + $0x8] sm:$0xf]
  %v117 = vld [vmem:[%s3 + $0xc] sm:$0xf]
  %v118 = vld [vmem:[%s3 + $0x10] sm:$0xf]
  %v119 = vld [vmem:[%s3 + $0x14] sm:$0xf]
  %v120 = vld [vmem:[%s3 + $0x18] sm:$0xf]
  %v121 = vld [vmem:[%s3 + $0x1c] sm:$0xf]
  %v122 = vld [vmem:[%s3 + $0x20] sm:$0xf]
  %v123 = vld [vmem:[%s3 + $0x24] sm:$0xf]
  %v124 = vld [vmem:[%s3 + $0x28] sm:$0xf]
  %v125 = vld [vmem:[%s3 + $0x2c] sm:$0xf]
  %v126 = vld [vmem:[%s3 + $0x30] sm:$0xf]
  %v127 = vld [vmem:[%s3 + $0x34] sm:$0xf]
  %v128 = vld [vmem:[%s3 + $0x38] sm:$0xf]
  %v129 = vld [vmem:[%s3 + $0x3c] sm:$0xf]
  %v130 = vld [vmem:[%s4] sm:$0x1]
  %v132 = vlaneseq
  %v133 = vshrl.u32 %v132, 7
  %v134 = vsub.s32 0, %v133
  %v135 = vrot.slane %v130, %v134
  %v153 = vunpack.c.l.b16 %v114
  %v154 = vunpack.c.l.b16 %v115
  %v155 = vunpack.c.l.b16 %v116
  %v156 = vunpack.c.l.b16 %v117
  %v157 = vunpack.c.l.b16 %v118
  %v158 = vunpack.c.l.b16 %v119
  %v159 = vunpack.c.l.b16 %v120
  %v160 = vunpack.c.l.b16 %v121
  %v161 = vunpack.c.l.b16 %v122
  %v162 = vunpack.c.l.b16 %v123
  %v163 = vunpack.c.l.b16 %v124
  %v164 = vunpack.c.l.b16 %v125
  %v165 = vunpack.c.l.b16 %v126
  %v166 = vunpack.c.l.b16 %v127
  %v167 = vunpack.c.l.b16 %v128
  %v168 = vunpack.c.l.b16 %v129
  %v169 = vpack.c.b16 %v154, %v153
  %v170 = vpack.c.b16 %v156, %v155
  %v171 = vpack.c.b16 %v158, %v157
  %v172 = vpack.c.b16 %v160, %v159
  %v173 = vpack.c.b16 %v162, %v161
  %v174 = vpack.c.b16 %v164, %v163
  %v175 = vpack.c.b16 %v166, %v165
  %v176 = vpack.c.b16 %v168, %v167
  %185 = vmatprep.subr.bf16.mxu0 0
  %186 = vmatpush1.bf16.msra.mxu0 %v169
  %187 = vmatprep.subr.bf16.mxu0 0
  %188 = vmatpush1.bf16.msra.mxu0 %v170
  %189 = vmatprep.subr.bf16.mxu0 0
  %190 = vmatpush1.bf16.msra.mxu0 %v171
  %191 = vmatprep.subr.bf16.mxu0 0
  %192 = vmatpush1.bf16.msra.mxu0 %v172
  %193 = vmatprep.subr.bf16.mxu0 0
  %194 = vmatpush1.bf16.msra.mxu0 %v173
  %195 = vmatprep.subr.bf16.mxu0 0
  %196 = vmatpush1.bf16.msra.mxu0 %v174
  %197 = vmatprep.subr.bf16.mxu0 0
  %198 = vmatpush1.bf16.msra.mxu0 %v175
  %199 = vmatprep.subr.bf16.mxu0 0
  %200 = vmatpush1.bf16.msra.mxu0 %v176
  %201 = vmatprep.subr.bf16.mxu0 0
  %202 = vmatpush1.bf16.msra.mxu0 0
  %203 = vmatprep.subr.bf16.mxu0 0
  %204 = vmatpush1.bf16.msra.mxu0 0
  %205 = vmatprep.subr.bf16.mxu0 0
  %206 = vmatpush1.bf16.msra.mxu0 0
  %207 = vmatprep.subr.bf16.mxu0 0
  %208 = vmatpush1.bf16.msra.mxu0 0
  %209 = vmatprep.subr.bf16.mxu0 0
  %210 = vmatpush1.bf16.msra.mxu0 0
  %211 = vmatprep.subr.bf16.mxu0 0
  %212 = vmatpush1.bf16.msra.mxu0 0
  %213 = vmatprep.subr.bf16.mxu0 0
  %214 = vmatpush1.bf16.msra.mxu0 0
  %215 = vmatprep.subr.bf16.mxu0 0
  %216 = vmatpush1.bf16.msra.mxu0 0
  %217 = vmatprep.mubr.bf16.mxu0 0
  %218 = vmatmul.mubr.bf16.gmra.mrb[0].mxu0 %v113
  %v219 = vpop.f32.mrb[0].mxu0
  %v220 = vadd.f32 %v135, %v219
  %v221 = vpop.f32.mrb[0].mxu0
  %v222 = vpop.f32.mrb[0].mxu0
  %v223 = vpop.f32.mrb[0].mxu0
  %224 = vdwg.mxu0
  %v225 = vmax.f32 %v220, 0.0
  %v226 = vpack.c.bf16 %v225, %v225
  %v227 = vld [vmem:[%s5] sm:$0xf]
  %v228 = vld [vmem:[%s5 + $0x4] sm:$0xf]
  %v229 = vld [vmem:[%s5 + $0x8] sm:$0xf]
  %v230 = vld [vmem:[%s5 + $0xc] sm:$0xf]
  %v231 = vld [vmem:[%s5 + $0x10] sm:$0xf]
  %v232 = vld [vmem:[%s5 + $0x14] sm:$0xf]
  %v233 = vld [vmem:[%s5 + $0x18] sm:$0xf]
  %v234 = vld [vmem:[%s5 + $0x1c] sm:$0xf]
  %v235 = vld [vmem:[%s6] sm:$0x1]
  %v237 = vlaneseq
  %v238 = vshrl.u32 %v237, 7
  %v239 = vsub.s32 0, %v238
  %v240 = vrot.slane %v235, %v239
  %v250 = vunpack.c.l.b16 %v227
  %v251 = vunpack.c.l.b16 %v228
  %v252 = vunpack.c.l.b16 %v229
  %v253 = vunpack.c.l.b16 %v230
  %v254 = vunpack.c.l.b16 %v231
  %v255 = vunpack.c.l.b16 %v232
  %v256 = vunpack.c.l.b16 %v233
  %v257 = vunpack.c.l.b16 %v234
  %v258 = vpack.c.b16 %v251, %v250
  %v259 = vpack.c.b16 %v253, %v252
  %v260 = vpack.c.b16 %v255, %v254
  %v261 = vpack.c.b16 %v257, %v256
  %v267 = vsel %vm68, %v226, 0
  %269 = vmatprep.subr.bf16.mxu0 0
  %270 = vmatpush1.bf16.msra.mxu0 %v258
  %271 = vmatprep.subr.bf16.mxu0 0
  %272 = vmatpush1.bf16.msra.mxu0 %v259
  %273 = vmatprep.subr.bf16.mxu0 0
  %274 = vmatpush1.bf16.msra.mxu0 %v260
  %275 = vmatprep.subr.bf16.mxu0 0
  %276 = vmatpush1.bf16.msra.mxu0 %v261
  %277 = vmatprep.subr.bf16.mxu0 0
  %278 = vmatpush1.bf16.msra.mxu0 0
  %279 = vmatprep.subr.bf16.mxu0 0
  %280 = vmatpush1.bf16.msra.mxu0 0
  %281 = vmatprep.subr.bf16.mxu0 0
  %282 = vmatpush1.bf16.msra.mxu0 0
  %283 = vmatprep.subr.bf16.mxu0 0
  %284 = vmatpush1.bf16.msra.mxu0 0
  %285 = vmatprep.subr.bf16.mxu0 0
  %286 = vmatpush1.bf16.msra.mxu0 0
  %287 = vmatprep.subr.bf16.mxu0 0
  %288 = vmatpush1.bf16.msra.mxu0 0
  %289 = vmatprep.subr.bf16.mxu0 0
  %290 = vmatpush1.bf16.msra.mxu0 0
  %291 = vmatprep.subr.bf16.mxu0 0
  %292 = vmatpush1.bf16.msra.mxu0 0
  %293 = vmatprep.subr.bf16.mxu0 0
  %294 = vmatpush1.bf16.msra.mxu0 0
  %295 = vmatprep.subr.bf16.mxu0 0
  %296 = vmatpush1.bf16.msra.mxu0 0
  %297 = vmatprep.subr.bf16.mxu0 0
  %298 = vmatpush1.bf16.msra.mxu0 0
  %299 = vmatprep.subr.bf16.mxu0 0
  %300 = vmatpush1.bf16.msra.mxu0 0
  %301 = vmatprep.mubr.bf16.mxu0 0
  %302 = vmatmul.mubr.bf16.gmra.mrb[0].mxu0 %v267
  %v303 = vpop.f32.mrb[0].mxu0
  %v304 = vadd.f32 %v240, %v303
  %v305 = vpop.f32.mrb[0].mxu0
  %v306 = vpop.f32.mrb[0].mxu0
  %v307 = vpop.f32.mrb[0].mxu0
  %308 = vdwg.mxu0
  %vm309 = vcmask 23552
  %310 = vst.msk [vmem:[%s7] sm:$0xff] %vm309, %v304
  // Predicated region
  $region30: #{_lambda_.1} parent=0 // pred_check
    _
  $region31: #{_lambda_.1} parent=0 // pred_check_branch
    %312 = sbr.rel (0) target = $region33
  $region32: #{_lambda_.1} parent=0 // pred_region
    _
  $region33: #{_lambda_.1} parent=0 // pred_fallthru
    _
  // Predicated region
  $region34: #{_lambda_.1} parent=0 // pred_check
    _
  $region35: #{_lambda_.1} parent=0 // pred_check_branch
    %314 = sbr.rel (0) target = $region37
  $region36: #{_lambda_.1} parent=0 // pred_region
    _
  $region37: #{_lambda_.1} parent=0 // pred_fallthru
    _

</llo_original>
